<compile_context>
chip_gen: v5e
topology: v5e:2x2
jax: 0.10.0
libtpu: 0.0.40
codegen_flags: <defaults>
</compile_context>

<pallas_src>
import jax
import jax.numpy as jnp
from jax.experimental import pallas as pl
from jax.experimental.pallas import tpu as pltpu


_LANE = 128
_BLOCK_BYTE_BUDGET = 4 * 1024 * 1024  # ~4 MiB per block (per perf review)


def _chomp_copy_kernel(x_ref, o_ref):
    # Identical (tr, tl) blocks: dense, unmasked full-tile copy.
    o_ref[...] = x_ref[...]


def _round_up(x: int, m: int) -> int:
    return ((x + m - 1) // m) * m


def chomp1d(x: jax.Array, chomp_size: int) -> jax.Array:
    """Pallas implementation of Chomp1d.forward for NCL inputs."""
    # Behavioral note: PyTorch's x[:, :, :-0] would return an empty tensor; TCN
    # always uses chomp_size = (kernel_size - 1) * dilation > 0, so require > 0.
    assert chomp_size > 0, "chomp_size must be positive"
    n, c, l = x.shape
    l_out = l - chomp_size
    assert l_out > 0, "chomp_size must be smaller than sequence length"

    if l_out < _LANE:
        # Perf review: output lane width < 128 forces masked partial stores and
        # tiny ragged DMAs, and each grid step still pays ~0.35 us.  A plain
        # XLA slice is strictly better here (and fusible into the consumer).
        return jax.lax.slice(x, (0, 0, 0), (n, c, l_out))

    r = n * c
    x2 = x.reshape(r, l)  # contiguous reshape, zero-cost
    itemsize = jnp.dtype(x.dtype).itemsize

    # ---- Row tile: balanced blocks <= 256 rows.  tr == r (full dim) is always
    # legal; otherwise round to a multiple of 32 (covers f32/bf16/int8 sublane
    # packing) and balance so there is no nearly-empty trailing row block.
    if r <= 256:
        tr = r
    else:
        n_row_blocks = pl.cdiv(r, 256)
        tr = min(_round_up(pl.cdiv(r, n_row_blocks), 32), r)

    # ---- Length tile: byte-budgeted and dtype-scaled (constant block bytes),
    # multiple of 128, and capped so that full tiles never read the chomped
    # tail (only the last partial tile touches padded columns).
    tl_budget = max(_LANE, (_BLOCK_BYTE_BUDGET // (tr * itemsize)) // _LANE * _LANE)
    tl = min(tl_budget, (l_out // _LANE) * _LANE)

    # ---- v7x has 2 TensorCores: make sure a non-trivial copy produces >= 2
    # grid programs along a parallel axis so both cores get work.  No-op on
    # v5e/v6e (single TC) and on tiny inputs.
    if pl.cdiv(r, tr) * pl.cdiv(l_out, tl) == 1 and r * l_out * itemsize > (2 << 20):
        if tl >= 2 * _LANE:
            tl = max(_LANE, (tl // 2) // _LANE * _LANE)
        elif tr >= 64:
            tr = _round_up(tr // 2, 32)

    grid = (pl.cdiv(r, tr), pl.cdiv(l_out, tl))

    y2 = pl.pallas_call(
        _chomp_copy_kernel,
        out_shape=jax.ShapeDtypeStruct((r, l_out), x.dtype),
        grid_spec=pltpu.PrefetchScalarGridSpec(
            num_scalar_prefetch=0,
            grid=grid,
            in_specs=[pl.BlockSpec((tr, tl), lambda i, t: (i, t))],
            out_specs=pl.BlockSpec((tr, tl), lambda i, t: (i, t)),
        ),
        compiler_params=pltpu.CompilerParams(
            # Pure copy, no reduction: both axes parallel (megacore sharding).
            dimension_semantics=("parallel", "parallel"),
            # Blocks are <= 4 MiB each; in + out, double-buffered ~= 16 MiB,
            # well inside v7x's 64 MiB physical / 32 MiB scoped VMEM.
            vmem_limit_bytes=32 * 1024 * 1024,
        ),
    )(x2)

    return y2.reshape(n, c, l_out)


def _check(x, chomp):
    y = jax.block_until_ready(chomp1d(x, chomp))
    ref = x[:, :, : x.shape[-1] - chomp]
    assert y.shape == ref.shape, (y.shape, ref.shape)
    assert y.dtype == x.dtype
    assert bool(jnp.array_equal(y, ref))


if __name__ == "__main__":
    key = jax.random.PRNGKey(0)
    k1, k2, k3, k4 = jax.random.split(key, 4)

    # 1) Small TCN-like shape (l_out < 128 -> XLA-slice fallback path).
    x1 = jax.random.normal(k1, (2, 4, 16), dtype=jnp.float32)
    _check(x1, 3)

    # 2) Lane-aligned case (Pallas tiled path; chomped tail is never DMA'd).
    x2 = jax.random.normal(k2, (2, 8, 384), dtype=jnp.float32)
    _check(x2, 128)

    # 3) Unaligned L_out >= 128 (Pallas tiled path; exercises the padded
    #    partial edge block whose input window extends past the row end).
    x3 = jax.random.normal(k3, (2, 4, 200), dtype=jnp.float32)
    _check(x3, 5)

    # 4) bf16 input (dtype-scaled length tile).
    x4 = jax.random.normal(k4, (4, 8, 300), dtype=jnp.float32).astype(jnp.bfloat16)
    _check(x4, 44)

    print("KERNEL_OK")
</pallas_src>

<mosaic_0001>
module attributes {stable_mosaic.version = 11 : i64} {
  func.func @_chomp_copy_kernel(%arg0: i32, %arg1: i32, %arg2: memref<16x256xf32, #tpu.memory_space<vmem>>, %arg3: memref<16x256xf32, #tpu.memory_space<vmem>>) attributes {dimension_semantics = [#tpu.dimension_semantics<parallel>, #tpu.dimension_semantics<parallel>], iteration_bounds = array<i64: 1, 1>, scalar_prefetch = 0 : i64, scratch_operands = 0 : i64, tpu.core_type = #tpu.core_type<tc>, window_params = [{transform_indices = @transform_0, window_bounds = array<i64: 16, 256>}, {transform_indices = @transform_1, window_bounds = array<i64: 16, 256>}]} {
    %c0 = arith.constant 0 : index
    %c0_0 = arith.constant 0 : index
    %0 = vector.load %arg2[%c0, %c0_0] : memref<16x256xf32, #tpu.memory_space<vmem>>, vector<16x256xf32>
    %c0_1 = arith.constant 0 : index
    %c0_2 = arith.constant 0 : index
    %1 = vector.load %arg3[%c0_1, %c0_2] : memref<16x256xf32, #tpu.memory_space<vmem>>, vector<16x256xf32>
    tpu.vector_store %arg3[%c0_1, %c0_2], %0 {strides = array<i32>} : memref<16x256xf32, #tpu.memory_space<vmem>>, vector<16x256xf32>,
    return
  }
  func.func @transform_0(%arg0: i32, %arg1: i32) -> (i32, i32) {
    %c0_i32 = arith.constant 0 : i32
    return %arg0, %arg1 : i32, i32
  }
  func.func @transform_1(%arg0: i32, %arg1: i32) -> (i32, i32) {
    %c0_i32 = arith.constant 0 : i32
    return %arg0, %arg1 : i32, i32
  }
}

</mosaic_0001>

<llo_original>
// kernel: tpu_custom_call.1
$region0: #{tpu_custom_call.1}
  #allocation0 [shape = 'u32[]', space=smem, size = 0x4, offset = 0x4, fixed_abs, tag = 'smem constant byte address 0x4 - core index']
  #allocation1 [shape = 'u32[72,128]{1,0:T(1,128)}', space=vmem, size = 0x9000, scoped, tag = 'internal scratch']
  %s0 = inlined_call_operand.hbm [shape: f32[16,384], index: 0, kind: input, shape index: {}]
  %s1 = inlined_call_operand.hbm [shape: f32[16,256], index: 1, kind: output, shape index: {}]
  %s2 = sld [smem:[#allocation0]]
  $region18: #{tpu_custom_call.1} parent=0
    _
  %s4 = ssub.s32 1, %s2
  %s5 = scalar_select 0, %s4, %s2
  $region1: #{tpu_custom_call.1} parent=0
    #allocation2 [shape = 'u8[16384]{0}', space=vmem, size = 0x4000, scoped, tag = 'input window, operand 0, single buffered']
    #allocation3 [shape = 's32[1]{0}', space=sflag, size = 0x4, scoped, tag = 'scoped memory for tpu_custom_call.1']
    #allocation4 [shape = 's32[1]{0}', space=sflag, size = 0x4, scoped, tag = 'scoped memory for tpu_custom_call.1']
    #allocation5 [shape = 'u8[16384]{0}', space=vmem, size = 0x4000, scoped, tag = 'output window, operand 0, single buffered']
    %6 = vsyncpa [#allocation3], 0
    %7 = vsyncpa [#allocation4], 0
    // Predicated region
    $region2: #{tpu_custom_call.1} parent=1 // pred_check
      _
    $region3: #{tpu_custom_call.1} parent=1 // pred_check_branch
      %9 = sbr.rel (0) target = $region5
    $region4: #{tpu_custom_call.1} parent=1 // pred_region
      %11 = vsyncadd [#allocation3], 0
      %s12 = sshll.u32 %s0, 4
      %s13 = int_to_ptr.hbm [resolvable:$true] %s12
      %s14 = sshll.u32 [#allocation2], 4
      %s15 = int_to_ptr.vmem [resolvable:$true] %s14
      %20 = dma.hbm_to_vmem [thread:$0]  %s13, 512, %s15, [#allocation3], 384, 256, 16
    $region5: #{tpu_custom_call.1} parent=1 // pred_fallthru
      _
    // Predicated region
    $region6: #{tpu_custom_call.1} parent=1 // pred_check
      _
    $region7: #{tpu_custom_call.1} parent=1 // pred_check_branch
      %22 = sbr.rel (0) target = $region9
    $region8: #{tpu_custom_call.1} parent=1 // pred_region
      %24 = dma.done [#allocation3], 512
    $region9: #{tpu_custom_call.1} parent=1 // pred_fallthru
      _
    %v25 = vld [vmem:[#allocation2] sm:$0xff]
    %v26 = vld [vmem:[#allocation2 + $0x8] sm:$0xff]
    %v27 = vld [vmem:[#allocation2 + $0x10] sm:$0xff]
    %v28 = vld [vmem:[#allocation2 + $0x18] sm:$0xff]
    %29 = vst [vmem:[#allocation5] sm:$0xff] %v25
    %30 = vst [vmem:[#allocation5 + $0x8] sm:$0xff] %v26
    %31 = vst [vmem:[#allocation5 + $0x10] sm:$0xff] %v27
    %32 = vst [vmem:[#allocation5 + $0x18] sm:$0xff] %v28
    // Predicated region
    $region10: #{tpu_custom_call.1} parent=1 // pred_check
      _
    $region11: #{tpu_custom_call.1} parent=1 // pred_check_branch
      %34 = sbr.rel (0) target = $region13
    $region12: #{tpu_custom_call.1} parent=1 // pred_region
      %36 = vsyncadd [#allocation4], 0
      %s37 = sshll.u32 [#allocation5], 4
      %s38 = int_to_ptr.vmem [resolvable:$true] %s37
      %s39 = sshll.u32 %s1, 4
      %s40 = int_to_ptr.hbm [resolvable:$true] %s39
      %45 = dma.vmem_to_hbm [thread:$0]  %s38, 512, %s40, [#allocation4], 256, 256, 16
    $region13: #{tpu_custom_call.1} parent=1 // pred_fallthru
      _
    // Predicated region
    $region14: #{tpu_custom_call.1} parent=1 // pred_check
      _
    $region15: #{tpu_custom_call.1} parent=1 // pred_check_branch
      %47 = sbr.rel (0) target = $region17
    $region16: #{tpu_custom_call.1} parent=1 // pred_region
      %49 = dma.done [#allocation4], 512
    $region17: #{tpu_custom_call.1} parent=1 // pred_fallthru
      _
    %50 = vsyncpa [#allocation3], 1
    %51 = vsyncpa [#allocation4], 1

</llo_original>
